<compile_context>
chip_gen: v7x
topology: tpu7x:2x2x1
jax: 0.10.0
libtpu: 0.0.40
codegen_flags: <defaults>
</compile_context>

<pallas_src>
import functools

import jax
import jax.numpy as jnp
from jax import lax
from jax.experimental import pallas as pl
from jax.experimental.pallas import tpu as pltpu


def _vbn_kernel(x_ref, scale_ref, bias_ref, o_ref, *, eps, inv_n, inv_nm1):
    # x_ref/o_ref: (N, tS, LANE); scale_ref/bias_ref: (1, tS, 1) or (1, tS, LANE), f32.
    xf = x_ref[...].astype(jnp.float32)

    # Reference-batch statistics over the fully-resident batch axis (pure VPU adds).
    mu = jnp.sum(xf, axis=0, keepdims=True) * inv_n                  # (1, tS, LANE)
    diff = xf - mu                                                   # ends xf's live range
    var = jnp.sum(diff * diff, axis=0, keepdims=True) * inv_nm1      # unbiased /(N-1)

    # y = (x - mu) * k + bias  (reference rounding order; avoids bias - mu*k cancellation)
    k = lax.rsqrt(var + eps) * scale_ref[...]                        # broadcast along lanes
    o_ref[...] = (diff * k + bias_ref[...]).astype(o_ref.dtype)


def _sublane_multiple(itemsize):
    # f32 -> 8 sublanes, bf16/f16 -> 16, int8/fp8 -> 32 (sub-32-bit packs along sublanes).
    return max(8, 32 // itemsize)


def _footprint_bytes(n, ts, lane, itemsize):
    # Double-buffered x in + y out blocks, tiny double-buffered param blocks, and
    # ~3 blocks of in-kernel f32 temporaries (xf/diff, stats, pre-store result).
    blk_in = n * ts * lane * itemsize
    blk_f32 = n * ts * lane * 4
    params = 2 * 2 * (ts * 4) * 2
    return 2 * 2 * blk_in + 3 * blk_f32 + params


def _choose_lane(hw, n, itemsize, sub, budget):
    """Largest lane width in {512,256,128} that divides H*W and whose minimal block
    fits the VMEM budget. Returns None if no lane divides H*W (padded fallback)."""
    for lane in (512, 256, 128):
        if hw % lane:
            continue
        if _footprint_bytes(n, sub, lane, itemsize) <= budget or lane == 128:
            return lane
    return None


def _pick_tile(n, s, lane, itemsize, sub, budget, target_bytes):
    """Pick tS: a sublane-aligned divisor of s (or s itself), fitting the VMEM budget,
    under the per-block streaming target, preferring a grid of >= 2 steps."""
    cands = [d for d in range(sub, s + 1, sub) if s % d == 0]
    if not cands:
        cands = [s]  # s < sub or no aligned divisor: full-extent block (allowed by BlockSpec)
    fitting = [t for t in cands if _footprint_bytes(n, t, lane, itemsize) <= budget]
    if not fitting:
        # TODO(synk): for very large N even the minimal (N, sub, LANE) block overflows
        # VMEM; add a third "arbitrary" grid axis over N with f32 sum/sumsq accumulators.
        fitting = [min(cands)]
    under = [t for t in fitting if n * t * lane * itemsize <= target_bytes]
    pool = under if under else [min(fitting)]
    # Prefer >= 2 grid steps so both v7x TensorCores stream (grid axis is "parallel");
    # harmless on v5e/v6e (single TensorCore).
    multi = [t for t in pool if s // t >= 2]
    if multi:
        pool = multi
    return max(pool)


def virtual_batch_norm(x, scale, bias, eps=1e-5):
    """x: (N, C, H, W) NCHW; scale, bias: (C,). Returns (N, C, H, W)."""
    N, C, H, W = x.shape
    if N < 2:
        raise ValueError("VirtualBatchNorm unbiased variance requires batch >= 2")

    F = C * H * W
    HW = H * W
    itemsize = jnp.dtype(x.dtype).itemsize
    sub = _sublane_multiple(itemsize)

    # Generation-aware VMEM sizing: ~40 MiB cap on v7x (64 MiB/TC), 64 MiB on v5e/v6e.
    try:
        vmem_cap = int(pltpu.get_tpu_info().vmem_capacity_bytes)
    except Exception:  # conservative fallback
        vmem_cap = 64 << 20
    vmem_limit = min(vmem_cap * 5 // 8, 64 << 20)
    budget = vmem_limit - (4 << 20)          # headroom for compiler-internal scratch
    target_bytes = 4 << 20                   # ~4 MiB of x per block (good on all gens)

    scale_f = scale.astype(jnp.float32)
    bias_f = bias.astype(jnp.float32)

    lane = _choose_lane(HW, N, itemsize, sub, budget)

    if lane is not None:
        # Fast path: LANE divides H*W -> pure (free) reshape of x, no padding, and every
        # (row, lanes) tile lies in one channel, so params are per-row (S,)-sized vectors.
        S = F // lane
        rows_per_c = HW // lane
        x3 = x.reshape(N, S, lane)
        scale3 = jnp.repeat(scale_f, rows_per_c).reshape(1, S, 1)
        bias3 = jnp.repeat(bias_f, rows_per_c).reshape(1, S, 1)
        param_last = 1
        F_pad = F
    else:
        # Fallback (H*W not a multiple of 128): pad the flattened feature axis and
        # materialize per-feature params.  Padded lanes carry x=0, scale=1, bias=0 ->
        # var=0 -> rsqrt(eps) is finite, so outputs there are exactly 0 (no NaN/Inf);
        # they are wasted lanes only.  Do not change the pad values.
        # TODO(synk): mask only the final tile in-kernel instead of padding in HBM.
        lane = 128
        F_pad = -(-F // (sub * lane)) * (sub * lane)
        S = F_pad // lane
        pad = F_pad - F
        x3 = jnp.pad(x.reshape(N, F), ((0, 0), (0, pad))).reshape(N, S, lane)
        scale3 = jnp.pad(jnp.repeat(scale_f, HW), (0, pad), constant_values=1.0
                         ).reshape(1, S, lane)
        bias3 = jnp.pad(jnp.repeat(bias_f, HW), (0, pad)).reshape(1, S, lane)
        param_last = lane

    tS = _pick_tile(N, S, lane, itemsize, sub, budget, target_bytes)
    grid = (S // tS,)

    # Never declare a limit below the actual double-buffered footprint.
    fp = _footprint_bytes(N, tS, lane, itemsize)
    vmem_limit = max(vmem_limit, min(fp + (4 << 20), vmem_cap))

    kernel = functools.partial(
        _vbn_kernel, eps=float(eps), inv_n=1.0 / N, inv_nm1=1.0 / (N - 1)
    )

    cost = pl.CostEstimate(
        flops=8 * N * S * lane,
        transcendentals=S * lane,
        bytes_accessed=2 * N * S * lane * itemsize + 2 * int(scale3.size) * 4,
    )

    out3 = pl.pallas_call(
        kernel,
        out_shape=jax.ShapeDtypeStruct((N, S, lane), x.dtype),
        grid=grid,
        in_specs=[
            pl.BlockSpec((N, tS, lane), lambda i: (0, i, 0)),
            pl.BlockSpec((1, tS, param_last), lambda i: (0, i, 0)),
            pl.BlockSpec((1, tS, param_last), lambda i: (0, i, 0)),
        ],
        out_specs=pl.BlockSpec((N, tS, lane), lambda i: (0, i, 0)),
        compiler_params=pltpu.CompilerParams(
            dimension_semantics=("parallel",),
            vmem_limit_bytes=int(vmem_limit),
        ),
        cost_estimate=cost,
    )(x3, scale3, bias3)

    if F_pad == F:
        return out3.reshape(N, C, H, W)
    return out3.reshape(N, F_pad)[:, :F].reshape(N, C, H, W)


def _reference(x, scale, bias, eps=1e-5):
    # Pure-JAX reference mirroring the PyTorch forward (first call: stats from x).
    xf = x.astype(jnp.float32)
    mu = jnp.mean(xf, axis=0, keepdims=True)
    var = jnp.var(xf, axis=0, keepdims=True, ddof=1)  # unbiased, like torch.var
    std = jnp.sqrt(eps + var)
    y = (xf - mu) / std
    y = y * scale.reshape(1, -1, 1, 1) + bias.reshape(1, -1, 1, 1)
    return y.astype(x.dtype)


if __name__ == "__main__":
    key = jax.random.PRNGKey(0)
    N, C, H, W = 2, 4, 16, 16

    x = jax.random.normal(key, (N, C, H, W), dtype=jnp.float32)

    # Module __init__ uses ones/zeros; use non-trivial deterministic values to
    # exercise the per-channel broadcast.
    scale = jnp.ones((C,), dtype=jnp.float32) + 0.1 * jnp.arange(C, dtype=jnp.float32)
    bias = 0.01 * jnp.arange(C, dtype=jnp.float32)

    out = virtual_batch_norm(x, scale, bias, eps=1e-5)
    out = jax.block_until_ready(out)

    ref = _reference(x, scale, bias, eps=1e-5)
    assert out.shape == (N, C, H, W)
    assert jnp.allclose(out, ref, atol=1e-5, rtol=1e-5)

    print("KERNEL_OK")
</pallas_src>

<mosaic_0001>
module attributes {stable_mosaic.version = 11 : i64} {
  func.func @_vbn_kernel(%arg0: i32, %arg1: memref<2x4x256xf32, #tpu.memory_space<vmem>>, %arg2: memref<1x4x1xf32, #tpu.memory_space<vmem>>, %arg3: memref<1x4x1xf32, #tpu.memory_space<vmem>>, %arg4: memref<2x4x256xf32, #tpu.memory_space<vmem>>) attributes {dimension_semantics = [#tpu.dimension_semantics<parallel>], iteration_bounds = array<i64: 1>, scalar_prefetch = 0 : i64, scratch_operands = 0 : i64, tpu.core_type = #tpu.core_type<tc>, window_params = [{transform_indices = @transform_0, window_bounds = array<i64: 2, 4, 256>}, {transform_indices = @transform_1, window_bounds = array<i64: 1, 4, 1>}, {transform_indices = @transform_2, window_bounds = array<i64: 1, 4, 1>}, {transform_indices = @transform_3, window_bounds = array<i64: 2, 4, 256>}]} {
    %c0 = arith.constant 0 : index
    %c0_0 = arith.constant 0 : index
    %c0_1 = arith.constant 0 : index
    %0 = vector.load %arg1[%c0, %c0_0, %c0_1] : memref<2x4x256xf32, #tpu.memory_space<vmem>>, vector<2x4x256xf32>
    %cst = arith.constant dense<0.000000e+00> : vector<4x256xf32>
    %1 = vector.multi_reduction <add>, %0, %cst [0] : vector<2x4x256xf32> to vector<4x256xf32>
    %2 = vector.shape_cast %1 : vector<4x256xf32> to vector<1x4x256xf32>
    %cst_2 = arith.constant 5.000000e-01 : f32
    %3 = vector.broadcast %cst_2 : f32 to vector<1x4x256xf32>
    %4 = arith.mulf %2, %3 : vector<1x4x256xf32>
    %5 = vector.broadcast %4 : vector<1x4x256xf32> to vector<2x4x256xf32>
    %6 = arith.subf %0, %5 : vector<2x4x256xf32>
    %7 = arith.mulf %6, %6 : vector<2x4x256xf32>
    %cst_3 = arith.constant dense<0.000000e+00> : vector<4x256xf32>
    %8 = vector.multi_reduction <add>, %7, %cst_3 [0] : vector<2x4x256xf32> to vector<4x256xf32>
    %9 = vector.shape_cast %8 : vector<4x256xf32> to vector<1x4x256xf32>
    %cst_4 = arith.constant 1.000000e+00 : f32
    %10 = vector.broadcast %cst_4 : f32 to vector<1x4x256xf32>
    %11 = arith.mulf %9, %10 : vector<1x4x256xf32>
    %cst_5 = arith.constant 9.99999974E-6 : f32
    %12 = vector.broadcast %cst_5 : f32 to vector<1x4x256xf32>
    %13 = arith.addf %11, %12 : vector<1x4x256xf32>
    %14 = math.rsqrt %13 : vector<1x4x256xf32>
    %c0_6 = arith.constant 0 : index
    %c0_7 = arith.constant 0 : index
    %c0_8 = arith.constant 0 : index
    %15 = vector.load %arg2[%c0_6, %c0_7, %c0_8] : memref<1x4x1xf32, #tpu.memory_space<vmem>>, vector<1x4x1xf32>
    %16 = vector.broadcast %15 : vector<1x4x1xf32> to vector<1x4x256xf32>
    %17 = arith.mulf %14, %16 : vector<1x4x256xf32>
    %18 = vector.broadcast %17 : vector<1x4x256xf32> to vector<2x4x256xf32>
    %19 = arith.mulf %6, %18 : vector<2x4x256xf32>
    %c0_9 = arith.constant 0 : index
    %c0_10 = arith.constant 0 : index
    %c0_11 = arith.constant 0 : index
    %20 = vector.load %arg3[%c0_9, %c0_10, %c0_11] : memref<1x4x1xf32, #tpu.memory_space<vmem>>, vector<1x4x1xf32>
    %21 = vector.broadcast %20 : vector<1x4x1xf32> to vector<2x4x256xf32>
    %22 = arith.addf %19, %21 : vector<2x4x256xf32>
    %c0_12 = arith.constant 0 : index
    %c0_13 = arith.constant 0 : index
    %c0_14 = arith.constant 0 : index
    %23 = vector.load %arg4[%c0_12, %c0_13, %c0_14] : memref<2x4x256xf32, #tpu.memory_space<vmem>>, vector<2x4x256xf32>
    tpu.vector_store %arg4[%c0_12, %c0_13, %c0_14], %22 {strides = array<i32>} : memref<2x4x256xf32, #tpu.memory_space<vmem>>, vector<2x4x256xf32>,
    return
  }
  func.func @transform_0(%arg0: i32) -> (i32, i32, i32) {
    %c0_i32 = arith.constant 0 : i32
    %c0_i32_0 = arith.constant 0 : i32
    %c0_i32_1 = arith.constant 0 : i32
    return %c0_i32, %arg0, %c0_i32_0 : i32, i32, i32
  }
  func.func @transform_1(%arg0: i32) -> (i32, i32, i32) {
    %c0_i32 = arith.constant 0 : i32
    %c0_i32_0 = arith.constant 0 : i32
    %c0_i32_1 = arith.constant 0 : i32
    return %c0_i32, %arg0, %c0_i32_0 : i32, i32, i32
  }
  func.func @transform_2(%arg0: i32) -> (i32, i32, i32) {
    %c0_i32 = arith.constant 0 : i32
    %c0_i32_0 = arith.constant 0 : i32
    %c0_i32_1 = arith.constant 0 : i32
    return %c0_i32, %arg0, %c0_i32_0 : i32, i32, i32
  }
  func.func @transform_3(%arg0: i32) -> (i32, i32, i32) {
    %c0_i32 = arith.constant 0 : i32
    %c0_i32_0 = arith.constant 0 : i32
    %c0_i32_1 = arith.constant 0 : i32
    return %c0_i32, %arg0, %c0_i32_0 : i32, i32, i32
  }
}

</mosaic_0001>

<llo_original>
// kernel: tpu_custom_call.1
$region0: #{tpu_custom_call.1}
  #allocation0 [shape = 'u32[]', space=smem, size = 0x4, offset = 0x4, fixed_abs, tag = 'smem constant byte address 0x4 - core index']
  #allocation1 [shape = 'u32[144,128]{1,0:T(1,128)}', space=vmem, size = 0x12000, scoped, tag = 'internal scratch']
  %s0 = inlined_call_operand.hbm [shape: f32[2,4,256], index: 0, kind: input, shape index: {}]
  %s1 = inlined_call_operand.vmem [shape: f32[1,4,1], index: 1, kind: input, shape index: {}]
  %s2 = inlined_call_operand.vmem [shape: f32[1,4,1], index: 2, kind: input, shape index: {}]
  %s3 = inlined_call_operand.hbm [shape: f32[2,4,256], index: 3, kind: output, shape index: {}]
  %s4 = sld [smem:[#allocation0]]
  $region26: #{tpu_custom_call.1} parent=0
    _
  %s6 = ssub.s32 1, %s4
  %s7 = scalar_select 0, %s6, %s4
  $region1: #{tpu_custom_call.1} parent=0
    #allocation2 [shape = 'u8[8192]{0}', space=vmem, size = 0x2000, scoped, tag = 'input window, operand 0, single buffered']
    #allocation3 [shape = 's32[1]{0}', space=sflag, size = 0x4, scoped, tag = 'scoped memory for tpu_custom_call.1']
    #allocation4 [shape = 's32[1]{0}', space=sflag, size = 0x4, scoped, tag = 'scoped memory for tpu_custom_call.1']
    #allocation5 [shape = 'u8[8192]{0}', space=vmem, size = 0x2000, scoped, tag = 'output window, operand 0, single buffered']
    %8 = vsyncpa [#allocation3], 0
    %9 = vsyncpa [#allocation4], 0
    // Predicated region
    $region2: #{tpu_custom_call.1} parent=1 // pred_check
      _
    $region3: #{tpu_custom_call.1} parent=1 // pred_check_branch
      %11 = sbr.rel (0) target = $region5
    $region4: #{tpu_custom_call.1} parent=1 // pred_region
      %s13 = ssub.s32 256, 256
      %14 = vsyncadd [#allocation3], %s13
      %s15 = sshll.u32 [#allocation2], 4
      %s16 = int_to_ptr.vmem [resolvable:$true] %s15
      %21 = dma.hbm_to_vmem [thread:$0]  %s0, 256, %s16, [#allocation3], 128, 128, 8
    $region5: #{tpu_custom_call.1} parent=1 // pred_fallthru
      _
    // Predicated region
    $region6: #{tpu_custom_call.1} parent=1 // pred_check
      _
    $region7: #{tpu_custom_call.1} parent=1 // pred_check_branch
      %23 = sbr.rel (0) target = $region9
    $region8: #{tpu_custom_call.1} parent=1 // pred_region
      _
    $region9: #{tpu_custom_call.1} parent=1 // pred_fallthru
      _
    // Predicated region
    $region10: #{tpu_custom_call.1} parent=1 // pred_check
      _
    $region11: #{tpu_custom_call.1} parent=1 // pred_check_branch
      %25 = sbr.rel (0) target = $region13
    $region12: #{tpu_custom_call.1} parent=1 // pred_region
      _
    $region13: #{tpu_custom_call.1} parent=1 // pred_fallthru
      _
    // Predicated region
    $region14: #{tpu_custom_call.1} parent=1 // pred_check
      _
    $region15: #{tpu_custom_call.1} parent=1 // pred_check_branch
      %27 = sbr.rel (0) target = $region17
    $region16: #{tpu_custom_call.1} parent=1 // pred_region
      %28 = dma.done [#allocation3], 256
    $region17: #{tpu_custom_call.1} parent=1 // pred_fallthru
      _
    %v29 = vld [vmem:[#allocation2] sm:$0xff]
    %v30 = vld [vmem:[#allocation2 + $0x8] sm:$0xff]
    %v33 = vcombine.high %v29, %v29
    %v34 = vcombine.high %v30, %v30
    %vm37 = vcmask 1043456
    %v38 = vsel %vm37, %v29, 0.0
    %v39 = vsel %vm37, %v30, 0.0
    %v40 = vadd.f32 %v38, %v39
    %v41 = vsel %vm37, %v33, 0.0
    %v42 = vsel %vm37, %v34, 0.0
    %v43 = vadd.f32 %v41, %v42
    %v44 = vmul.f32 %v40, 0.5
    %v45 = vmul.f32 %v43, 0.5
    %v48 = vcombine.low %v44, %v45
    %v50 = vsub.f32 %v29, %v48
    %v51 = vsub.f32 %v30, %v48
    %v52 = vmul.f32 %v50, %v50
    %v53 = vmul.f32 %v51, %v51
    %v56 = vcombine.high %v52, %v52
    %v57 = vcombine.high %v53, %v53
    %v60 = vsel %vm37, %v52, 0.0
    %v61 = vsel %vm37, %v53, 0.0
    %v62 = vadd.f32 %v60, %v61
    %v63 = vsel %vm37, %v56, 0.0
    %v64 = vsel %vm37, %v57, 0.0
    %v65 = vadd.f32 %v63, %v64
    %v66 = vadd.f32 %v62, 1e-05
    %v67 = vadd.f32 %v65, 1e-05
    %v68 = vrsqrt.pop %v66
    %v69 = vrsqrt.pop %v67
    %v70 = vld [vmem:[%s1] sm:$0xf]
    %72 = vset.pattern.permute.xlu0 0
    %73 = vperm.xlu0 %72, %v70
    %v74 = vpop.permute.xlu0 %73
    %v76 = vmul.f32 %v68, %v74
    %v77 = vmul.f32 %v69, %v74
    %v80 = vcombine.low %v76, %v77
    %v82 = vmul.f32 %v50, %v80
    %v83 = vmul.f32 %v51, %v80
    %v84 = vld [vmem:[%s2] sm:$0xf]
    %86 = vset.pattern.permute.xlu0 0
    %87 = vperm.xlu0 %86, %v84
    %v88 = vpop.permute.xlu0 %87
    %v90 = vunpack.c.l.s4 839922192
    %v91 = vunpack.c.0.s8 %v90
    %v92 = vlaneseq
    %v93 = vshrl.u32 %v92, 7
    %v94 = vsub.s32 %v91, %v93
    %v95 = vrot.slane %v88, %v94
    %v97 = vadd.f32 %v82, %v95
    %v98 = vadd.f32 %v83, %v95
    %99 = vst [vmem:[#allocation5] sm:$0xff] %v97
    %100 = vst [vmem:[#allocation5 + $0x8] sm:$0xff] %v98
    // Predicated region
    $region18: #{tpu_custom_call.1} parent=1 // pred_check
      _
    $region19: #{tpu_custom_call.1} parent=1 // pred_check_branch
      %102 = sbr.rel (0) target = $region21
    $region20: #{tpu_custom_call.1} parent=1 // pred_region
      %s104 = ssub.s32 256, 256
      %105 = vsyncadd [#allocation4], %s104
      %s106 = sshll.u32 [#allocation5], 4
      %s107 = int_to_ptr.vmem [resolvable:$true] %s106
      %112 = dma.vmem_to_hbm [thread:$0]  %s107, 256, %s3, [#allocation4], 128, 128, 8
    $region21: #{tpu_custom_call.1} parent=1 // pred_fallthru
      _
    // Predicated region
    $region22: #{tpu_custom_call.1} parent=1 // pred_check
      _
    $region23: #{tpu_custom_call.1} parent=1 // pred_check_branch
      %114 = sbr.rel (0) target = $region25
    $region24: #{tpu_custom_call.1} parent=1 // pred_region
      %115 = dma.done [#allocation4], 256
    $region25: #{tpu_custom_call.1} parent=1 // pred_fallthru
      _
    %116 = vsyncpa [#allocation3], 1
    %117 = vsyncpa [#allocation4], 1

</llo_original>
